<compile_context>
chip_gen: v7x
topology: tpu7x:2x2x1
jax: 0.10.0
libtpu: 0.0.40
codegen_flags: <defaults>
</compile_context>

<pallas_src>
import jax
import jax.numpy as jnp
from jax.experimental import pallas as pl
from jax.experimental.pallas import tpu as pltpu


def _round_up(x, m):
    return ((x + m - 1) // m) * m


def _largest_tile(requested, padded, quantum):
    """Largest multiple of `quantum` that divides `padded` and is <= requested."""
    t = min(_round_up(int(requested), quantum), padded)
    t = max((t // quantum) * quantum, quantum)
    while padded % t:
        t -= quantum
    return t


# ----------------------------- kernel bodies ------------------------------ #

def _linear_kernel_fused(x_ref, w_ref, b_ref, o_ref):
    # Single K step: whole (padded) Din resident in VMEM; bias fused.
    o_ref[...] = (
        jnp.dot(x_ref[...], w_ref[...], preferred_element_type=jnp.float32)
        + b_ref[...]
    ).astype(o_ref.dtype)


def _linear_kernel_ksum_f32out(x_ref, w_ref, b_ref, o_ref):
    # Multi-K reduction; f32 output block is resident across K -> accumulate
    # directly into o_ref (no scratch, no finalize copy).
    k = pl.program_id(2)

    @pl.when(k == 0)
    def _init():
        o_ref[...] = jnp.broadcast_to(b_ref[...], o_ref.shape)

    o_ref[...] += jnp.dot(
        x_ref[...], w_ref[...], preferred_element_type=jnp.float32
    )


def _linear_kernel_ksum_acc(x_ref, w_ref, b_ref, o_ref, acc_ref):
    # Multi-K reduction with f32 VMEM accumulator (for narrow output dtypes).
    k = pl.program_id(2)

    @pl.when(k == 0)
    def _init():
        acc_ref[...] = jnp.broadcast_to(b_ref[...], acc_ref.shape)

    acc_ref[...] += jnp.dot(
        x_ref[...], w_ref[...], preferred_element_type=jnp.float32
    )

    @pl.when(k == pl.num_programs(2) - 1)
    def _finalize():
        o_ref[...] = acc_ref[...].astype(o_ref.dtype)


# ------------------------------- wrappers ---------------------------------- #

def prepare_params(weight, bias, *, compute_dtype=jnp.bfloat16):
    """One-time parameter prep: cast the weight to the compute dtype and
    zero-pad weight/bias to lane-aligned (multiple-of-128) shapes so the
    per-call hot path does no padding or casting of the parameters."""
    din, dout = weight.shape
    kp = _round_up(din, 128)
    np_ = _round_up(dout, 128)
    dt = compute_dtype if compute_dtype is not None else weight.dtype
    w_p = jnp.pad(weight, ((0, kp - din), (0, np_ - dout))).astype(dt)
    b_p = jnp.pad(bias.astype(jnp.float32), (0, np_ - dout)).reshape(1, np_)
    return w_p, b_p


def linear_0_to_0(x, weight, bias, *, dim_out=None, compute_dtype=jnp.bfloat16,
                  out_dtype=None, tm=512, tn=512, tk=1024, max_single_k=2048,
                  vmem_limit_bytes=None):
    """Pallas equivalent of Linear(ord_in=0, ord_out=0).forward(x):
         out = x @ weight + bias[None, :]
    Accepts raw or pre-padded (prepare_params) weight/bias and arbitrary
    B / Din / Dout (zero padding contributes zero to the reduction)."""
    B, Din = x.shape
    Kw, Nw = weight.shape
    if out_dtype is None:
        out_dtype = x.dtype
    out_dtype = jnp.dtype(out_dtype)
    compute_dtype = jnp.dtype(compute_dtype if compute_dtype is not None
                              else x.dtype)

    # Logical output width (needed when weight/bias were pre-padded).
    if dim_out is None:
        dim_out = bias.shape[0] if bias.ndim == 1 else Nw
    Dout = int(dim_out)

    Kp = _round_up(Kw, 128)
    Np = _round_up(Nw, 128)
    assert _round_up(Din, 128) == Kp, "x / weight inner-dim mismatch"

    # --- activations: cast + pad per call (they change every call anyway) ---
    if x.dtype != compute_dtype:
        x = x.astype(compute_dtype)
    sublane = 16 if compute_dtype == jnp.dtype(jnp.bfloat16) else 8

    tm = min(int(tm), _round_up(B, sublane))
    tm = _round_up(tm, sublane)
    Mp = _round_up(B, tm)
    tn = _largest_tile(tn, Np, 128)

    # Guarantee >=2 spatial blocks when possible so both v7x TCs get work.
    gm, gn = Mp // tm, Np // tn
    if gm * gn == 1:
        if Np >= 256 and tn == Np:
            for cand in range(tn - 128, 127, -128):
                if Np % cand == 0:
                    tn = cand
                    break
        elif B >= 2 * sublane:
            tm = _round_up(-(-B // 2), sublane)
            Mp = _round_up(B, tm)
        gm, gn = Mp // tm, Np // tn

    in_bytes = compute_dtype.itemsize
    out_bytes = out_dtype.itemsize

    # --- single-K fast path when (padded) Din fits comfortably in VMEM -------
    use_single_k = Kp <= int(max_single_k)
    if use_single_k:
        need_sk = (2 * (tm * Kp + Kp * tn) * in_bytes
                   + 2 * tm * tn * out_bytes + 2 * Np * 4)
        if need_sk > (44 << 20):
            use_single_k = False
    tk = Kp if use_single_k else _largest_tile(tk, Kp, 128)

    # --- pad/cast parameters only if the caller did not pre-prepare them ----
    w_p = weight
    if w_p.shape != (Kp, Np) or w_p.dtype != compute_dtype:
        # Cold path: prefer prepare_params() so this copy is not per-call.
        w_p = jnp.pad(weight, ((0, Kp - Kw), (0, Np - Nw))).astype(compute_dtype)
    if bias.ndim == 1:
        b_p = bias.astype(jnp.float32)
        if b_p.shape[0] != Np:
            b_p = jnp.pad(b_p, (0, Np - b_p.shape[0]))
        b_p = b_p.reshape(1, Np)
    else:
        b_p = bias.astype(jnp.float32)
        assert b_p.shape == (1, Np)
    x_p = x if (Mp, Kp) == (B, Din) else jnp.pad(x, ((0, Mp - B), (0, Kp - Din)))

    # --- kernel / grid selection --------------------------------------------
    scratch = []
    if use_single_k:
        grid = (gm, gn)
        kernel = _linear_kernel_fused
        in_specs = [
            pl.BlockSpec((tm, Kp), lambda i, j: (i, 0)),
            pl.BlockSpec((Kp, tn), lambda i, j: (0, j)),
            pl.BlockSpec((1, tn), lambda i, j: (0, j)),
        ]
        out_spec = pl.BlockSpec((tm, tn), lambda i, j: (i, j))
        semantics = ("parallel", "parallel")
        gk = 1
    else:
        gk = Kp // tk
        grid = (gm, gn, gk)
        in_specs = [
            pl.BlockSpec((tm, tk), lambda i, j, k: (i, k)),
            pl.BlockSpec((tk, tn), lambda i, j, k: (k, j)),
            pl.BlockSpec((1, tn), lambda i, j, k: (0, j)),
        ]
        out_spec = pl.BlockSpec((tm, tn), lambda i, j, k: (i, j))
        semantics = ("parallel", "parallel", "arbitrary")
        if out_dtype == jnp.dtype(jnp.float32):
            kernel = _linear_kernel_ksum_f32out
        else:
            kernel = _linear_kernel_ksum_acc
            scratch = [pltpu.VMEM((tm, tn), jnp.float32)]

    if vmem_limit_bytes is None:
        need = 2 * (tm * tk + tk * tn) * in_bytes
        need += 2 * tm * tn * out_bytes + 2 * Np * 4
        if scratch:
            need += tm * tn * 4
        # Cap at 48 MiB: valid on v7x (64 MiB physical) and v5e/v6e (128 MiB).
        vmem_limit_bytes = int(min(max(2 * need, 32 << 20), 48 << 20))

    cost = pl.CostEstimate(
        flops=2 * Mp * Kp * Np,
        transcendentals=0,
        bytes_accessed=int(gn * Mp * Kp * in_bytes      # x re-streamed gn times
                           + gm * Kp * Np * in_bytes    # W re-streamed gm times
                           + Np * 4 + Mp * Np * out_bytes),
    )

    out_p = pl.pallas_call(
        kernel,
        out_shape=jax.ShapeDtypeStruct((Mp, Np), out_dtype),
        grid=grid,
        in_specs=in_specs,
        out_specs=out_spec,
        scratch_shapes=scratch,
        compiler_params=pltpu.CompilerParams(
            dimension_semantics=semantics,
            vmem_limit_bytes=vmem_limit_bytes,
        ),
        cost_estimate=cost,
    )(x_p, w_p, b_p)

    if (Mp, Np) != (B, Dout):
        out_p = out_p[:B, :Dout]
    return out_p


def init_params(key, dim_in, dim_out, n_w=1):
    """Deterministic init matching _Weight/_Bias.reset_parameters.

    weight: xavier_normal_ on [dim_in * n_w, dim_out]
            -> std = sqrt(2 / (dim_in*n_w + dim_out))
    bias:   constant 0.0
    """
    fan_sum = dim_in * n_w + dim_out
    std = (2.0 / fan_sum) ** 0.5
    w = std * jax.random.normal(key, (dim_in * n_w, dim_out), dtype=jnp.float32)
    b = jnp.zeros((dim_out,), dtype=jnp.float32)
    return w, b


if __name__ == "__main__":
    key = jax.random.PRNGKey(0)
    k_x, k_w, k_x2, k_w2, k_b2, k_x3, k_w3, k_b3 = jax.random.split(key, 8)

    # --- Test 1: small (0,0) forward, default bf16 compute, pre-padded params,
    #             single-K fused kernel. -------------------------------------
    batch, dim_in, dim_out = 16, 32, 64
    x = jax.random.normal(k_x, (batch, dim_in), dtype=jnp.float32)
    weight, bias = init_params(k_w, dim_in, dim_out, n_w=1)
    w_prep, b_prep = prepare_params(weight, bias)          # once, outside hot path

    out = jax.block_until_ready(
        linear_0_to_0(x, w_prep, b_prep, dim_out=dim_out))
    ref_bf16 = (jnp.dot(x.astype(jnp.bfloat16), weight.astype(jnp.bfloat16),
                        preferred_element_type=jnp.float32) + bias[None, :])
    assert out.shape == (batch, dim_out)
    assert out.dtype == x.dtype
    assert jnp.allclose(out, ref_bf16, atol=1e-2, rtol=1e-2)

    # --- Test 2: non-aligned shapes, f32 compute, forced multi-K reduction,
    #             direct accumulation into the resident f32 output block. ----
    b2, din2, dout2 = 96, 200, 130
    x2 = jax.random.normal(k_x2, (b2, din2), dtype=jnp.float32)
    w2 = 0.05 * jax.random.normal(k_w2, (din2, dout2), dtype=jnp.float32)
    bias2 = jax.random.normal(k_b2, (dout2,), dtype=jnp.float32)
    out2 = jax.block_until_ready(
        linear_0_to_0(x2, w2, bias2, compute_dtype=None,
                      tm=32, tn=128, tk=128, max_single_k=128))
    ref2 = x2 @ w2 + bias2[None, :]
    assert out2.shape == (b2, dout2)
    assert jnp.allclose(out2, ref2, atol=1e-4, rtol=1e-4)

    # --- Test 3: bf16 in/out, multi-K reduction with f32 scratch accumulator.
    b3, din3, dout3 = 24, 300, 192
    x3 = jax.random.normal(k_x3, (b3, din3), dtype=jnp.float32).astype(jnp.bfloat16)
    w3 = (0.05 * jax.random.normal(k_w3, (din3, dout3),
                                   dtype=jnp.float32)).astype(jnp.bfloat16)
    bias3 = jax.random.normal(k_b3, (dout3,), dtype=jnp.float32)
    out3 = jax.block_until_ready(
        linear_0_to_0(x3, w3, bias3, tk=128, max_single_k=128))
    ref3 = jnp.dot(x3, w3, preferred_element_type=jnp.float32) + bias3[None, :]
    assert out3.shape == (b3, dout3)
    assert out3.dtype == jnp.bfloat16
    assert jnp.allclose(out3.astype(jnp.float32), ref3, atol=2e-2, rtol=2e-2)

    print("KERNEL_OK")
</pallas_src>

<mosaic_0001>
module attributes {stable_mosaic.version = 11 : i64} {
  func.func @_linear_kernel_fused(%arg0: i32, %arg1: i32, %arg2: memref<16x128xbf16, #tpu.memory_space<vmem>>, %arg3: memref<128x128xbf16, #tpu.memory_space<vmem>>, %arg4: memref<1x128xf32, #tpu.memory_space<vmem>>, %arg5: memref<16x128xf32, #tpu.memory_space<vmem>>) attributes {dimension_semantics = [#tpu.dimension_semantics<parallel>, #tpu.dimension_semantics<parallel>], iteration_bounds = array<i64: 1, 1>, scalar_prefetch = 0 : i64, scratch_operands = 0 : i64, tpu.core_type = #tpu.core_type<tc>, window_params = [{transform_indices = @transform_0, window_bounds = array<i64: 16, 128>}, {transform_indices = @transform_1, window_bounds = array<i64: 128, 128>}, {transform_indices = @transform_2, window_bounds = array<i64: 1, 128>}, {transform_indices = @transform_3, window_bounds = array<i64: 16, 128>}]} {
    %c0 = arith.constant 0 : index
    %c0_0 = arith.constant 0 : index
    %0 = vector.load %arg2[%c0, %c0_0] : memref<16x128xbf16, #tpu.memory_space<vmem>>, vector<16x128xbf16>
    %c0_1 = arith.constant 0 : index
    %c0_2 = arith.constant 0 : index
    %1 = vector.load %arg3[%c0_1, %c0_2] : memref<128x128xbf16, #tpu.memory_space<vmem>>, vector<128x128xbf16>
    %cst = arith.constant dense<0.000000e+00> : vector<16x128xf32>
    %2 = tpu.matmul %0, %1, %cst {dimension_numbers = #tpu.dot_dimension_numbers<[1], [0], [0], [1], [0, 0, 1, 1], [], []>} : vector<16x128xbf16>, vector<128x128xbf16>, vector<16x128xf32> -> vector<16x128xf32>
    %c0_3 = arith.constant 0 : index
    %c0_4 = arith.constant 0 : index
    %3 = vector.load %arg4[%c0_3, %c0_4] : memref<1x128xf32, #tpu.memory_space<vmem>>, vector<1x128xf32>
    %4 = vector.broadcast %3 : vector<1x128xf32> to vector<16x128xf32>
    %5 = arith.addf %2, %4 : vector<16x128xf32>
    %c0_5 = arith.constant 0 : index
    %c0_6 = arith.constant 0 : index
    %6 = vector.load %arg5[%c0_5, %c0_6] : memref<16x128xf32, #tpu.memory_space<vmem>>, vector<16x128xf32>
    tpu.vector_store %arg5[%c0_5, %c0_6], %5 {strides = array<i32>} : memref<16x128xf32, #tpu.memory_space<vmem>>, vector<16x128xf32>,
    return
  }
  func.func @transform_0(%arg0: i32, %arg1: i32) -> (i32, i32) {
    %c0_i32 = arith.constant 0 : i32
    %c0_i32_0 = arith.constant 0 : i32
    return %arg0, %c0_i32 : i32, i32
  }
  func.func @transform_1(%arg0: i32, %arg1: i32) -> (i32, i32) {
    %c0_i32 = arith.constant 0 : i32
    %c0_i32_0 = arith.constant 0 : i32
    return %c0_i32, %arg1 : i32, i32
  }
  func.func @transform_2(%arg0: i32, %arg1: i32) -> (i32, i32) {
    %c0_i32 = arith.constant 0 : i32
    %c0_i32_0 = arith.constant 0 : i32
    return %c0_i32, %arg1 : i32, i32
  }
  func.func @transform_3(%arg0: i32, %arg1: i32) -> (i32, i32) {
    %c0_i32 = arith.constant 0 : i32
    return %arg0, %arg1 : i32, i32
  }
}

</mosaic_0001>

<llo_original>
// kernel: tpu_custom_call.1
$region0: #{tpu_custom_call.1}
  #allocation0 [shape = 'u32[]', space=smem, size = 0x4, offset = 0x4, fixed_abs, tag = 'smem constant byte address 0x4 - core index']
  #allocation1 [shape = 'u32[144,128]{1,0:T(1,128)}', space=vmem, size = 0x12000, scoped, tag = 'internal scratch']
  %s0 = inlined_call_operand.hbm [shape: bf16[16,128], index: 0, kind: input, shape index: {}]
  %s1 = inlined_call_operand.hbm [shape: bf16[128,128], index: 1, kind: input, shape index: {}]
  %s2 = inlined_call_operand.vmem [shape: f32[1,128], index: 2, kind: input, shape index: {}]
  %s3 = inlined_call_operand.hbm [shape: f32[16,128], index: 3, kind: output, shape index: {}]
  %s4 = sld [smem:[#allocation0]]
  $region30: #{tpu_custom_call.1} parent=0
    _
  %s6 = ssub.s32 1, %s4
  %s7 = scalar_select 0, %s6, %s4
  $region1: #{tpu_custom_call.1} parent=0
    #allocation2 [shape = 'u8[4096]{0}', space=vmem, size = 0x1000, scoped, tag = 'input window, operand 0, single buffered']
    #allocation3 [shape = 's32[1]{0}', space=sflag, size = 0x4, scoped, tag = 'scoped memory for tpu_custom_call.1']
    #allocation4 [shape = 's32[1]{0}', space=sflag, size = 0x4, scoped, tag = 'scoped memory for tpu_custom_call.1']
    #allocation5 [shape = 'u8[32768]{0}', space=vmem, size = 0x8000, scoped, tag = 'input window, operand 1, single buffered']
    #allocation6 [shape = 's32[1]{0}', space=sflag, size = 0x4, scoped, tag = 'scoped memory for tpu_custom_call.1']
    #allocation7 [shape = 'u8[8192]{0}', space=vmem, size = 0x2000, scoped, tag = 'output window, operand 0, single buffered']
    %8 = vsyncpa [#allocation3], 0
    %9 = vsyncpa [#allocation6], 0
    %10 = vsyncpa [#allocation4], 0
    // Predicated region
    $region2: #{tpu_custom_call.1} parent=1 // pred_check
      _
    $region3: #{tpu_custom_call.1} parent=1 // pred_check_branch
      %12 = sbr.rel (0) target = $region5
    $region4: #{tpu_custom_call.1} parent=1 // pred_region
      %s14 = ssub.s32 128, 128
      %15 = vsyncadd [#allocation3], %s14
      %s16 = sshll.u32 [#allocation2], 4
      %s17 = int_to_ptr.vmem [resolvable:$true] %s16
      %22 = dma.hbm_to_vmem [thread:$0]  %s0, 128, %s17, [#allocation3], 64, 64, 4
    $region5: #{tpu_custom_call.1} parent=1 // pred_fallthru
      _
    // Predicated region
    $region6: #{tpu_custom_call.1} parent=1 // pred_check
      _
    $region7: #{tpu_custom_call.1} parent=1 // pred_check_branch
      %24 = sbr.rel (0) target = $region9
    $region8: #{tpu_custom_call.1} parent=1 // pred_region
      %s26 = ssub.s32 1024, 1024
      %27 = vsyncadd [#allocation6], %s26
      %s28 = sshll.u32 [#allocation5], 4
      %s29 = int_to_ptr.vmem [resolvable:$true] %s28
      %34 = dma.hbm_to_vmem [thread:$0]  %s1, 1024, %s29, [#allocation6], 64, 64, 4
    $region9: #{tpu_custom_call.1} parent=1 // pred_fallthru
      _
    // Predicated region
    $region10: #{tpu_custom_call.1} parent=1 // pred_check
      _
    $region11: #{tpu_custom_call.1} parent=1 // pred_check_branch
      %36 = sbr.rel (0) target = $region13
    $region12: #{tpu_custom_call.1} parent=1 // pred_region
      _
    $region13: #{tpu_custom_call.1} parent=1 // pred_fallthru
      _
    // Predicated region
    $region14: #{tpu_custom_call.1} parent=1 // pred_check
      _
    $region15: #{tpu_custom_call.1} parent=1 // pred_check_branch
      %38 = sbr.rel (0) target = $region17
    $region16: #{tpu_custom_call.1} parent=1 // pred_region
      %39 = dma.done [#allocation3], 128
    $region17: #{tpu_custom_call.1} parent=1 // pred_fallthru
      _
    // Predicated region
    $region18: #{tpu_custom_call.1} parent=1 // pred_check
      _
    $region19: #{tpu_custom_call.1} parent=1 // pred_check_branch
      %41 = sbr.rel (0) target = $region21
    $region20: #{tpu_custom_call.1} parent=1 // pred_region
      %42 = dma.done [#allocation6], 1024
    $region21: #{tpu_custom_call.1} parent=1 // pred_fallthru
      _
    %v44 = vld [vmem:[#allocation2] sm:$0xf]
    %v45 = vld [vmem:[#allocation2 + $0x4] sm:$0xf]
    %v46 = vld [vmem:[#allocation5] sm:$0xf]
    %v47 = vld [vmem:[#allocation5 + $0x4] sm:$0xf]
    %v48 = vld [vmem:[#allocation5 + $0x8] sm:$0xf]
    %v49 = vld [vmem:[#allocation5 + $0xc] sm:$0xf]
    %v50 = vld [vmem:[#allocation5 + $0x10] sm:$0xf]
    %v51 = vld [vmem:[#allocation5 + $0x14] sm:$0xf]
    %v52 = vld [vmem:[#allocation5 + $0x18] sm:$0xf]
    %v53 = vld [vmem:[#allocation5 + $0x1c] sm:$0xf]
    %v54 = vld [vmem:[#allocation5 + $0x20] sm:$0xf]
    %v55 = vld [vmem:[#allocation5 + $0x24] sm:$0xf]
    %v56 = vld [vmem:[#allocation5 + $0x28] sm:$0xf]
    %v57 = vld [vmem:[#allocation5 + $0x2c] sm:$0xf]
    %v58 = vld [vmem:[#allocation5 + $0x30] sm:$0xf]
    %v59 = vld [vmem:[#allocation5 + $0x34] sm:$0xf]
    %v60 = vld [vmem:[#allocation5 + $0x38] sm:$0xf]
    %v61 = vld [vmem:[#allocation5 + $0x3c] sm:$0xf]
    %v62 = vld [vmem:[%s2] sm:$0x1]
    %v64 = vlaneseq
    %v65 = vshrl.u32 %v64, 7
    %v66 = vsub.s32 0, %v65
    %v67 = vrot.slane %v62, %v66
    %v71 = vunpack.c.l.b16 %v44
    %v72 = vunpack.c.l.b16 %v45
    %v73 = vpack.c.b16 %v72, %v71
    %v91 = vunpack.c.l.b16 %v46
    %v92 = vunpack.c.l.b16 %v47
    %v93 = vunpack.c.l.b16 %v48
    %v94 = vunpack.c.l.b16 %v49
    %v95 = vunpack.c.l.b16 %v50
    %v96 = vunpack.c.l.b16 %v51
    %v97 = vunpack.c.l.b16 %v52
    %v98 = vunpack.c.l.b16 %v53
    %v99 = vunpack.c.l.b16 %v54
    %v100 = vunpack.c.l.b16 %v55
    %v101 = vunpack.c.l.b16 %v56
    %v102 = vunpack.c.l.b16 %v57
    %v103 = vunpack.c.l.b16 %v58
    %v104 = vunpack.c.l.b16 %v59
    %v105 = vunpack.c.l.b16 %v60
    %v106 = vunpack.c.l.b16 %v61
    %v107 = vpack.c.b16 %v92, %v91
    %v108 = vpack.c.b16 %v94, %v93
    %v109 = vpack.c.b16 %v96, %v95
    %v110 = vpack.c.b16 %v98, %v97
    %v111 = vpack.c.b16 %v100, %v99
    %v112 = vpack.c.b16 %v102, %v101
    %v113 = vpack.c.b16 %v104, %v103
    %v114 = vpack.c.b16 %v106, %v105
    %123 = vmatprep.subr.bf16.mxu0 0
    %124 = vmatpush1.bf16.msra.mxu0 %v107
    %125 = vmatprep.subr.bf16.mxu0 0
    %126 = vmatpush1.bf16.msra.mxu0 %v108
    %127 = vmatprep.subr.bf16.mxu0 0
    %128 = vmatpush1.bf16.msra.mxu0 %v109
    %129 = vmatprep.subr.bf16.mxu0 0
    %130 = vmatpush1.bf16.msra.mxu0 %v110
    %131 = vmatprep.subr.bf16.mxu0 0
    %132 = vmatpush1.bf16.msra.mxu0 %v111
    %133 = vmatprep.subr.bf16.mxu0 0
    %134 = vmatpush1.bf16.msra.mxu0 %v112
    %135 = vmatprep.subr.bf16.mxu0 0
    %136 = vmatpush1.bf16.msra.mxu0 %v113
    %137 = vmatprep.subr.bf16.mxu0 0
    %138 = vmatpush1.bf16.msra.mxu0 %v114
    %139 = vmatprep.subr.bf16.mxu0 0
    %140 = vmatpush1.bf16.msra.mxu0 0
    %141 = vmatprep.subr.bf16.mxu0 0
    %142 = vmatpush1.bf16.msra.mxu0 0
    %143 = vmatprep.subr.bf16.mxu0 0
    %144 = vmatpush1.bf16.msra.mxu0 0
    %145 = vmatprep.subr.bf16.mxu0 0
    %146 = vmatpush1.bf16.msra.mxu0 0
    %147 = vmatprep.subr.bf16.mxu0 0
    %148 = vmatpush1.bf16.msra.mxu0 0
    %149 = vmatprep.subr.bf16.mxu0 0
    %150 = vmatpush1.bf16.msra.mxu0 0
    %151 = vmatprep.subr.bf16.mxu0 0
    %152 = vmatpush1.bf16.msra.mxu0 0
    %153 = vmatprep.subr.bf16.mxu0 0
    %154 = vmatpush1.bf16.msra.mxu0 0
    %155 = vmatprep.mubr.bf16.mxu0 0
    %156 = vmatmul.mubr.bf16.gmra.mrb[0].mxu0 %v73
    %v157 = vpop.f32.mrb[0].mxu0
    %v158 = vadd.f32 %v67, %v157
    %v159 = vpop.f32.mrb[0].mxu0
    %v160 = vpop.f32.mrb[0].mxu0
    %v161 = vadd.f32 %v67, %v160
    %v162 = vpop.f32.mrb[0].mxu0
    %163 = vdwg.mxu0
    %164 = vst [vmem:[#allocation7] sm:$0xff] %v158
    %165 = vst [vmem:[#allocation7 + $0x8] sm:$0xff] %v161
    // Predicated region
    $region22: #{tpu_custom_call.1} parent=1 // pred_check
      _
    $region23: #{tpu_custom_call.1} parent=1 // pred_check_branch
      %167 = sbr.rel (0) target = $region25
    $region24: #{tpu_custom_call.1} parent=1 // pred_region
      %s169 = ssub.s32 256, 256
      %170 = vsyncadd [#allocation4], %s169
      %s171 = sshll.u32 [#allocation7], 4
      %s172 = int_to_ptr.vmem [resolvable:$true] %s171
      %177 = dma.vmem_to_hbm [thread:$0]  %s172, 256, %s3, [#allocation4], 128, 128, 8
    $region25: #{tpu_custom_call.1} parent=1 // pred_fallthru
      _
    // Predicated region
    $region26: #{tpu_custom_call.1} parent=1 // pred_check
      _
    $region27: #{tpu_custom_call.1} parent=1 // pred_check_branch
      %179 = sbr.rel (0) target = $region29
    $region28: #{tpu_custom_call.1} parent=1 // pred_region
      %180 = dma.done [#allocation4], 256
    $region29: #{tpu_custom_call.1} parent=1 // pred_fallthru
      _
    %181 = vsyncpa [#allocation3], 1
    %182 = vsyncpa [#allocation6], 1
    %183 = vsyncpa [#allocation4], 1

</llo_original>
